<compile_context>
chip_gen: v6e
topology: v6e:2x2x1
jax: 0.10.0
libtpu: 0.0.40
codegen_flags: <defaults>
</compile_context>

<pallas_src>
import jax
import jax.numpy as jnp
from jax.experimental import pallas as pl
from jax.experimental.pallas import tpu as pltpu


def _round_up(x, m):
    return (x + m - 1) // m * m


def _cnn_text_kernel(win_ref,   # (TB, L_pad, K_pad)  bf16 im2col windows (lane-dense K)
                     wf_ref,    # (K_pad, N_pad)      bf16 fused conv weight
                     bp_ref,    # (L_pad, N_pad)      f32 conv bias + (-1e30 at invalid pos)
                     fcw_ref,   # (N_pad, O_pad)      bf16 fc weight (zero-padded)
                     fcb_ref,   # (1, O_pad)          f32 fc bias (zero-padded)
                     out_ref):  # (TB, O_pad)         f32 logits (padded)
    TB, L_pad, K_pad = win_ref.shape

    # One fused MXU matmul covering every tap of every filter bank.
    # L_pad % 8 == 0 and K_pad % 128 == 0, so the reshapes are layout-preserving.
    win2d = win_ref[...].reshape(TB * L_pad, K_pad)
    conv = jnp.dot(win2d, wf_ref[...], preferred_element_type=jnp.float32)
    conv = conv.reshape(TB, L_pad, -1)

    # Bias add and invalid-window penalty folded into one VPU add, then ReLU.
    # ReLU output >= 0, so penalized (-> 0) positions never affect the max.
    conv = jnp.maximum(conv + bp_ref[...][None, :, :], 0.0)
    pooled = jnp.max(conv, axis=1)                           # (TB, N_pad) max-over-time

    # dropout == identity at inference time.
    out_ref[...] = (
        jnp.dot(pooled.astype(jnp.bfloat16), fcw_ref[...],
                preferred_element_type=jnp.float32)
        + fcb_ref[...])


def cnn_text_forward(tokens, params, filter_sizes, *, batch_tile=512):
    """tokens: (B, S) int32.  Returns logits (B, O) float32."""
    emb_table = params['embedding']                 # (V, E) f32
    B, S = tokens.shape
    E = emb_table.shape[1]
    F = params['conv0_b'].shape[-1]
    O = params['fc_b'].shape[-1]
    max_fs = max(filter_sizes)

    N = len(filter_sizes) * F
    N_pad = _round_up(N, 128)                       # lane-dense conv/pool width
    O_pad = _round_up(O, 128)                       # lane-dense output store
    K = max_fs * E
    K_pad = _round_up(K, 128)                       # lane-dense im2col width
    L = S                                           # windows per sequence (seq right-padded)
    L_pad = _round_up(L, 8)

    # ---- batch tiling: multiple of 8, avoid B_pad inflation, >=2 grid steps ----
    B8 = _round_up(B, 8)
    tb_cap = max(8, _round_up(min(batch_tile, B8), 8))
    n_tiles = -(-B8 // tb_cap)
    if B8 >= 16:
        n_tiles = max(n_tiles, 2)                   # feed both v7x TensorCores
    TB = _round_up(-(-B8 // n_tiles), 8)
    B_pad = TB * n_tiles

    # ---- wrapper glue (XLA): bf16 gather + lane-dense im2col ----
    # TODO(synk): fuse this gather into the kernel (tokens block + VMEM table).
    emb = jnp.take(emb_table.astype(jnp.bfloat16), tokens, axis=0)      # (B, S, E) bf16
    emb = jnp.pad(emb, ((0, B_pad - B), (0, max_fs - 1), (0, 0)))       # (B_pad, S+max_fs-1, E)
    win = jnp.concatenate([emb[:, i:i + L, :] for i in range(max_fs)],
                          axis=-1)                                      # (B_pad, L, K)
    win = jnp.pad(win, ((0, 0), (0, L_pad - L), (0, K_pad - K)))        # (B_pad, L_pad, K_pad)

    # ---- fuse all conv filter banks into one (K_pad, N_pad) weight ----
    # PyTorch Conv2d weight (F, 1, fs, E) corresponds to our (fs, E, F) layout
    # via w_torch.squeeze(1).permute(1, 2, 0).
    w_blocks = []
    for k, fs in enumerate(filter_sizes):
        w = params[f'conv{k}_w']                                        # (fs, E, F)
        w_full = jnp.zeros((max_fs, E, F), jnp.float32).at[:fs].set(w)
        w_blocks.append(w_full.reshape(K, F))
    w_fused = jnp.zeros((K_pad, N_pad), jnp.float32).at[:K, :N].set(
        jnp.concatenate(w_blocks, axis=1)).astype(jnp.bfloat16)

    # Precomputed additive bias + penalty: b[n] at valid window positions,
    # -1e30 at invalid ones (beyond each bank's valid length, padded L rows,
    # and padded N columns).
    b_cat = jnp.concatenate(
        [params[f'conv{k}_b'].reshape(F) for k in range(len(filter_sizes))])
    vl_cat = jnp.concatenate(
        [jnp.full((F,), S - fs + 1, jnp.int32) for fs in filter_sizes])
    b_full = jnp.zeros((N_pad,), jnp.float32).at[:N].set(b_cat)
    vl_full = jnp.zeros((N_pad,), jnp.int32).at[:N].set(vl_cat)
    pos = jnp.arange(L_pad, dtype=jnp.int32)[:, None]                   # (L_pad, 1)
    bias_pen = jnp.where(pos < vl_full[None, :], b_full[None, :],
                         jnp.float32(-1e30))                            # (L_pad, N_pad)

    fc_w = jnp.zeros((N_pad, O_pad), jnp.float32).at[:N, :O].set(
        params['fc_w']).astype(jnp.bfloat16)
    fc_b = jnp.zeros((1, O_pad), jnp.float32).at[:, :O].set(params['fc_b'])

    out = pl.pallas_call(
        _cnn_text_kernel,
        out_shape=jax.ShapeDtypeStruct((B_pad, O_pad), jnp.float32),
        grid=(B_pad // TB,),
        in_specs=[
            pl.BlockSpec((TB, L_pad, K_pad), lambda i: (i, 0, 0)),
            pl.BlockSpec((K_pad, N_pad), lambda i: (0, 0)),
            pl.BlockSpec((L_pad, N_pad), lambda i: (0, 0)),
            pl.BlockSpec((N_pad, O_pad), lambda i: (0, 0)),
            pl.BlockSpec((1, O_pad), lambda i: (0, 0)),
        ],
        out_specs=pl.BlockSpec((TB, O_pad), lambda i: (i, 0)),
        compiler_params=pltpu.CompilerParams(
            dimension_semantics=("parallel",),
            vmem_limit_bytes=48 * 1024 * 1024),
    )(win, w_fused, bias_pen, fc_w, fc_b)

    return out[:B, :O]


def cnn_text_reference(tokens, params, filter_sizes):
    """Pure-JAX f32 reference mirroring the PyTorch forward (eval mode)."""
    emb = jnp.take(params['embedding'], tokens, axis=0).astype(jnp.float32)
    B, S, E = emb.shape
    pooled = []
    for k, fs in enumerate(filter_sizes):
        w = params[f'conv{k}_w']                     # (fs, E, F)
        b = params[f'conv{k}_b']                     # (1, F)
        L = S - fs + 1
        acc = jnp.zeros((B, L, w.shape[-1]), jnp.float32)
        for i in range(fs):
            acc = acc + jnp.einsum('ble,ef->blf', emb[:, i:i + L, :], w[i])
        acc = jax.nn.relu(acc + b)
        pooled.append(jnp.max(acc, axis=1))
    cat = jnp.concatenate(pooled, axis=-1)
    return cat @ params['fc_w'] + params['fc_b']


def init_params(key, vocab_size, embed_dim, num_filters, filter_sizes, output_dim):
    keys = jax.random.split(key, 3 + 2 * len(filter_sizes))
    params = {
        'embedding': 0.1 * jax.random.normal(
            keys[0], (vocab_size, embed_dim), jnp.float32),
    }
    for k, fs in enumerate(filter_sizes):
        fan_in = fs * embed_dim
        params[f'conv{k}_w'] = jax.random.normal(
            keys[1 + 2 * k], (fs, embed_dim, num_filters), jnp.float32
        ) / jnp.sqrt(jnp.float32(fan_in))
        params[f'conv{k}_b'] = 0.01 * jax.random.normal(
            keys[2 + 2 * k], (1, num_filters), jnp.float32)
    in_features = len(filter_sizes) * num_filters
    params['fc_w'] = jax.random.normal(
        keys[-2], (in_features, output_dim), jnp.float32
    ) / jnp.sqrt(jnp.float32(in_features))
    params['fc_b'] = 0.01 * jax.random.normal(
        keys[-1], (1, output_dim), jnp.float32)
    return params


if __name__ == "__main__":
    # Small, module-consistent shapes.
    vocab_size = 50
    embed_dim = 32
    num_filters = 16
    filter_sizes = (2, 3, 4)
    output_dim = 4
    batch = 2
    seq_len = 16

    root = jax.random.PRNGKey(0)
    k_params, k_tokens = jax.random.split(root)
    params = init_params(k_params, vocab_size, embed_dim, num_filters,
                         filter_sizes, output_dim)
    tokens = jax.random.randint(k_tokens, (batch, seq_len), 0, vocab_size,
                                dtype=jnp.int32)

    logits = cnn_text_forward(tokens, params, filter_sizes)
    logits = jax.block_until_ready(logits)

    ref = cnn_text_reference(tokens, params, filter_sizes)
    assert logits.shape == (batch, output_dim)
    # bf16 MXU inputs with f32 accumulation -> relax tolerance vs the f32 ref.
    assert jnp.allclose(logits, ref, atol=2e-2, rtol=2e-2), (
        jnp.max(jnp.abs(logits - ref)))

    print("KERNEL_OK")
</pallas_src>

<mosaic_0001>
module attributes {stable_mosaic.version = 11 : i64} {
  func.func @_cnn_text_kernel(%arg0: i32, %arg1: memref<8x16x128xbf16, #tpu.memory_space<vmem>>, %arg2: memref<128x128xbf16, #tpu.memory_space<vmem>>, %arg3: memref<16x128xf32, #tpu.memory_space<vmem>>, %arg4: memref<128x128xbf16, #tpu.memory_space<vmem>>, %arg5: memref<1x128xf32, #tpu.memory_space<vmem>>, %arg6: memref<8x128xf32, #tpu.memory_space<vmem>>) attributes {dimension_semantics = [#tpu.dimension_semantics<parallel>], iteration_bounds = array<i64: 1>, scalar_prefetch = 0 : i64, scratch_operands = 0 : i64, tpu.core_type = #tpu.core_type<tc>, window_params = [{transform_indices = @transform_0, window_bounds = array<i64: 8, 16, 128>}, {pipeline_mode = #tpu.pipeline_mode<synchronous>, transform_indices = @transform_1, window_bounds = array<i64: 128, 128>}, {pipeline_mode = #tpu.pipeline_mode<synchronous>, transform_indices = @transform_2, window_bounds = array<i64: 16, 128>}, {pipeline_mode = #tpu.pipeline_mode<synchronous>, transform_indices = @transform_3, window_bounds = array<i64: 128, 128>}, {pipeline_mode = #tpu.pipeline_mode<synchronous>, transform_indices = @transform_4, window_bounds = array<i64: 1, 128>}, {transform_indices = @transform_5, window_bounds = array<i64: 8, 128>}]} {
    %c0 = arith.constant 0 : index
    %c0_0 = arith.constant 0 : index
    %c0_1 = arith.constant 0 : index
    %0 = vector.load %arg1[%c0, %c0_0, %c0_1] : memref<8x16x128xbf16, #tpu.memory_space<vmem>>, vector<8x16x128xbf16>
    %1 = vector.shape_cast %0 : vector<8x16x128xbf16> to vector<128x128xbf16>
    %c0_2 = arith.constant 0 : index
    %c0_3 = arith.constant 0 : index
    %2 = vector.load %arg2[%c0_2, %c0_3] : memref<128x128xbf16, #tpu.memory_space<vmem>>, vector<128x128xbf16>
    %cst = arith.constant dense<0.000000e+00> : vector<128x128xf32>
    %3 = tpu.matmul %1, %2, %cst {dimension_numbers = #tpu.dot_dimension_numbers<[1], [0], [0], [1], [0, 0, 1, 1], [], []>} : vector<128x128xbf16>, vector<128x128xbf16>, vector<128x128xf32> -> vector<128x128xf32>
    %4 = vector.shape_cast %3 : vector<128x128xf32> to vector<8x16x128xf32>
    %c0_4 = arith.constant 0 : index
    %c0_5 = arith.constant 0 : index
    %5 = vector.load %arg3[%c0_4, %c0_5] : memref<16x128xf32, #tpu.memory_space<vmem>>, vector<16x128xf32>
    %6 = vector.shape_cast %5 : vector<16x128xf32> to vector<1x16x128xf32>
    %7 = vector.broadcast %6 : vector<1x16x128xf32> to vector<8x16x128xf32>
    %8 = arith.addf %4, %7 : vector<8x16x128xf32>
    %cst_6 = arith.constant 0.000000e+00 : f32
    %9 = vector.broadcast %cst_6 : f32 to vector<8x16x128xf32>
    %10 = arith.maximumf %8, %9 : vector<8x16x128xf32>
    %cst_7 = arith.constant dense<0xFF800000> : vector<8x128xf32>
    %11 = vector.multi_reduction <maximumf>, %10, %cst_7 [1] : vector<8x16x128xf32> to vector<8x128xf32>
    %12 = arith.truncf %11 : vector<8x128xf32> to vector<8x128xbf16>
    %c0_8 = arith.constant 0 : index
    %c0_9 = arith.constant 0 : index
    %13 = vector.load %arg4[%c0_8, %c0_9] : memref<128x128xbf16, #tpu.memory_space<vmem>>, vector<128x128xbf16>
    %cst_10 = arith.constant dense<0.000000e+00> : vector<8x128xf32>
    %14 = tpu.matmul %12, %13, %cst_10 {dimension_numbers = #tpu.dot_dimension_numbers<[1], [0], [0], [1], [0, 0, 1, 1], [], []>} : vector<8x128xbf16>, vector<128x128xbf16>, vector<8x128xf32> -> vector<8x128xf32>
    %c0_11 = arith.constant 0 : index
    %c0_12 = arith.constant 0 : index
    %15 = vector.load %arg5[%c0_11, %c0_12] : memref<1x128xf32, #tpu.memory_space<vmem>>, vector<1x128xf32>
    %16 = vector.broadcast %15 : vector<1x128xf32> to vector<8x128xf32>
    %17 = arith.addf %14, %16 : vector<8x128xf32>
    %c0_13 = arith.constant 0 : index
    %c0_14 = arith.constant 0 : index
    %18 = vector.load %arg6[%c0_13, %c0_14] : memref<8x128xf32, #tpu.memory_space<vmem>>, vector<8x128xf32>
    tpu.vector_store %arg6[%c0_13, %c0_14], %17 {strides = array<i32>} : memref<8x128xf32, #tpu.memory_space<vmem>>, vector<8x128xf32>,
    return
  }
  func.func @transform_0(%arg0: i32) -> (i32, i32, i32) {
    %c0_i32 = arith.constant 0 : i32
    %c0_i32_0 = arith.constant 0 : i32
    %c0_i32_1 = arith.constant 0 : i32
    return %arg0, %c0_i32, %c0_i32_0 : i32, i32, i32
  }
  func.func @transform_1(%arg0: i32) -> (i32, i32) {
    %c0_i32 = arith.constant 0 : i32
    %c0_i32_0 = arith.constant 0 : i32
    %c0_i32_1 = arith.constant 0 : i32
    return %c0_i32, %c0_i32_0 : i32, i32
  }
  func.func @transform_2(%arg0: i32) -> (i32, i32) {
    %c0_i32 = arith.constant 0 : i32
    %c0_i32_0 = arith.constant 0 : i32
    %c0_i32_1 = arith.constant 0 : i32
    return %c0_i32, %c0_i32_0 : i32, i32
  }
  func.func @transform_3(%arg0: i32) -> (i32, i32) {
    %c0_i32 = arith.constant 0 : i32
    %c0_i32_0 = arith.constant 0 : i32
    %c0_i32_1 = arith.constant 0 : i32
    return %c0_i32, %c0_i32_0 : i32, i32
  }
  func.func @transform_4(%arg0: i32) -> (i32, i32) {
    %c0_i32 = arith.constant 0 : i32
    %c0_i32_0 = arith.constant 0 : i32
    %c0_i32_1 = arith.constant 0 : i32
    return %c0_i32, %c0_i32_0 : i32, i32
  }
  func.func @transform_5(%arg0: i32) -> (i32, i32) {
    %c0_i32 = arith.constant 0 : i32
    %c0_i32_0 = arith.constant 0 : i32
    return %arg0, %c0_i32 : i32, i32
  }
}

</mosaic_0001>

<llo_original>
// kernel: tpu_custom_call.1
$region0: #{tpu_custom_call.1}
  #allocation0 [shape = 'u32[]', space=smem, size = 0x4, offset = 0x4, fixed_abs, tag = 'smem constant byte address 0x4 - core index']
  #allocation1 [shape = 'u32[144,128]{1,0:T(1,128)}', space=vmem, size = 0x12000, scoped, tag = 'internal scratch']
  %s0 = inlined_call_operand.hbm [shape: bf16[8,16,128], index: 0, kind: input, shape index: {}]
  %s1 = inlined_call_operand.hbm [shape: bf16[128,128], index: 1, kind: input, shape index: {}]
  %s2 = inlined_call_operand.hbm [shape: f32[16,128], index: 2, kind: input, shape index: {}]
  %s3 = inlined_call_operand.hbm [shape: bf16[128,128], index: 3, kind: input, shape index: {}]
  %s4 = inlined_call_operand.vmem [shape: f32[1,128], index: 4, kind: input, shape index: {}]
  %s5 = inlined_call_operand.hbm [shape: f32[8,128], index: 5, kind: output, shape index: {}]
  %s6 = sld [smem:[#allocation0]]
  $region46: #{tpu_custom_call.1} parent=0
    _
  %s8 = ssub.s32 1, %s6
  %s9 = scalar_select 0, %s8, %s6
  $region1: #{tpu_custom_call.1} parent=0
    #allocation2 [shape = 'u8[32768]{0}', space=vmem, size = 0x8000, scoped, tag = 'input window, operand 0, single buffered']
    #allocation3 [shape = 's32[1]{0}', space=sflag, size = 0x4, scoped, tag = 'scoped memory for tpu_custom_call.1']
    #allocation4 [shape = 's32[1]{0}', space=sflag, size = 0x4, scoped, tag = 'scoped memory for tpu_custom_call.1']
    #allocation5 [shape = 'u8[32768]{0}', space=vmem, size = 0x8000, scoped, tag = 'input window, operand 1, single buffered']
    #allocation6 [shape = 's32[1]{0}', space=sflag, size = 0x4, scoped, tag = 'scoped memory for tpu_custom_call.1']
    #allocation7 [shape = 'u8[8192]{0}', space=vmem, size = 0x2000, scoped, tag = 'input window, operand 2, single buffered']
    #allocation8 [shape = 'u8[32768]{0}', space=vmem, size = 0x8000, scoped, tag = 'input window, operand 3, single buffered']
    #allocation9 [shape = 's32[1]{0}', space=sflag, size = 0x4, scoped, tag = 'scoped memory for tpu_custom_call.1']
    #allocation10 [shape = 'u8[4096]{0}', space=vmem, size = 0x1000, scoped, tag = 'output window, operand 0, single buffered']
    %10 = vsyncpa [#allocation3], 0
    %11 = vsyncpa [#allocation6], 0
    %12 = vsyncpa [#allocation9], 0
    %13 = vsyncpa [#allocation4], 0
    // Predicated region
    $region2: #{tpu_custom_call.1} parent=1 // pred_check
      _
    $region3: #{tpu_custom_call.1} parent=1 // pred_check_branch
      %15 = sbr.rel (0) target = $region5
    $region4: #{tpu_custom_call.1} parent=1 // pred_region
      %s17 = ssub.s32 1024, 1024
      %18 = vsyncadd [#allocation3], %s17
      %s19 = sshll.u32 [#allocation2], 4
      %s20 = int_to_ptr.vmem [resolvable:$true] %s19
      %25 = dma.hbm_to_vmem [thread:$0]  %s0, 1024, %s20, [#allocation3], 64, 64, 4
    $region5: #{tpu_custom_call.1} parent=1 // pred_fallthru
      _
    // Predicated region
    $region6: #{tpu_custom_call.1} parent=1 // pred_check
      _
    $region7: #{tpu_custom_call.1} parent=1 // pred_check_branch
      %27 = sbr.rel (0) target = $region9
    $region8: #{tpu_custom_call.1} parent=1 // pred_region
      %s29 = ssub.s32 1024, 1024
      %30 = vsyncadd [#allocation6], %s29
      %s31 = sshll.u32 [#allocation5], 4
      %s32 = int_to_ptr.vmem [resolvable:$true] %s31
      %37 = dma.hbm_to_vmem [thread:$0]  %s1, 1024, %s32, [#allocation6], 64, 64, 4
    $region9: #{tpu_custom_call.1} parent=1 // pred_fallthru
      _
    // Predicated region
    $region10: #{tpu_custom_call.1} parent=1 // pred_check
      _
    $region11: #{tpu_custom_call.1} parent=1 // pred_check_branch
      %39 = sbr.rel (0) target = $region13
    $region12: #{tpu_custom_call.1} parent=1 // pred_region
      %s41 = ssub.s32 256, 256
      %42 = vsyncadd [#allocation6], %s41
      %s43 = sshll.u32 [#allocation7], 4
      %s44 = int_to_ptr.vmem [resolvable:$true] %s43
      %49 = dma.hbm_to_vmem [thread:$0]  %s2, 256, %s44, [#allocation6], 128, 128, 8
    $region13: #{tpu_custom_call.1} parent=1 // pred_fallthru
      _
    // Predicated region
    $region14: #{tpu_custom_call.1} parent=1 // pred_check
      _
    $region15: #{tpu_custom_call.1} parent=1 // pred_check_branch
      %51 = sbr.rel (0) target = $region17
    $region16: #{tpu_custom_call.1} parent=1 // pred_region
      %s53 = ssub.s32 1024, 1024
      %54 = vsyncadd [#allocation9], %s53
      %s55 = sshll.u32 [#allocation8], 4
      %s56 = int_to_ptr.vmem [resolvable:$true] %s55
      %61 = dma.hbm_to_vmem [thread:$0]  %s3, 1024, %s56, [#allocation9], 64, 64, 4
    $region17: #{tpu_custom_call.1} parent=1 // pred_fallthru
      _
    // Predicated region
    $region18: #{tpu_custom_call.1} parent=1 // pred_check
      _
    $region19: #{tpu_custom_call.1} parent=1 // pred_check_branch
      %63 = sbr.rel (0) target = $region21
    $region20: #{tpu_custom_call.1} parent=1 // pred_region
      _
    $region21: #{tpu_custom_call.1} parent=1 // pred_fallthru
      _
    // Predicated region
    $region22: #{tpu_custom_call.1} parent=1 // pred_check
      _
    $region23: #{tpu_custom_call.1} parent=1 // pred_check_branch
      %65 = sbr.rel (0) target = $region25
    $region24: #{tpu_custom_call.1} parent=1 // pred_region
      %66 = dma.done [#allocation3], 1024
    $region25: #{tpu_custom_call.1} parent=1 // pred_fallthru
      _
    // Predicated region
    $region26: #{tpu_custom_call.1} parent=1 // pred_check
      _
    $region27: #{tpu_custom_call.1} parent=1 // pred_check_branch
      %68 = sbr.rel (0) target = $region29
    $region28: #{tpu_custom_call.1} parent=1 // pred_region
      %69 = dma.done [#allocation6], 1024
    $region29: #{tpu_custom_call.1} parent=1 // pred_fallthru
      _
    // Predicated region
    $region30: #{tpu_custom_call.1} parent=1 // pred_check
      _
    $region31: #{tpu_custom_call.1} parent=1 // pred_check_branch
      %71 = sbr.rel (0) target = $region33
    $region32: #{tpu_custom_call.1} parent=1 // pred_region
      %72 = dma.done [#allocation6], 256
    $region33: #{tpu_custom_call.1} parent=1 // pred_fallthru
      _
    // Predicated region
    $region34: #{tpu_custom_call.1} parent=1 // pred_check
      _
    $region35: #{tpu_custom_call.1} parent=1 // pred_check_branch
      %74 = sbr.rel (0) target = $region37
    $region36: #{tpu_custom_call.1} parent=1 // pred_region
      %75 = dma.done [#allocation9], 1024
    $region37: #{tpu_custom_call.1} parent=1 // pred_fallthru
      _
    %v77 = vld [vmem:[#allocation2] sm:$0xf]
    %v78 = vld [vmem:[#allocation2 + $0x4] sm:$0xf]
    %v79 = vld [vmem:[#allocation2 + $0x8] sm:$0xf]
    %v80 = vld [vmem:[#allocation2 + $0xc] sm:$0xf]
    %v81 = vld [vmem:[#allocation2 + $0x10] sm:$0xf]
    %v82 = vld [vmem:[#allocation2 + $0x14] sm:$0xf]
    %v83 = vld [vmem:[#allocation2 + $0x18] sm:$0xf]
    %v84 = vld [vmem:[#allocation2 + $0x1c] sm:$0xf]
    %v85 = vld [vmem:[#allocation2 + $0x20] sm:$0xf]
    %v86 = vld [vmem:[#allocation2 + $0x24] sm:$0xf]
    %v87 = vld [vmem:[#allocation2 + $0x28] sm:$0xf]
    %v88 = vld [vmem:[#allocation2 + $0x2c] sm:$0xf]
    %v89 = vld [vmem:[#allocation2 + $0x30] sm:$0xf]
    %v90 = vld [vmem:[#allocation2 + $0x34] sm:$0xf]
    %v91 = vld [vmem:[#allocation2 + $0x38] sm:$0xf]
    %v92 = vld [vmem:[#allocation2 + $0x3c] sm:$0xf]
    %v93 = vld [vmem:[#allocation5] sm:$0xf]
    %v94 = vld [vmem:[#allocation5 + $0x4] sm:$0xf]
    %v95 = vld [vmem:[#allocation5 + $0x8] sm:$0xf]
    %v96 = vld [vmem:[#allocation5 + $0xc] sm:$0xf]
    %v97 = vld [vmem:[#allocation5 + $0x10] sm:$0xf]
    %v98 = vld [vmem:[#allocation5 + $0x14] sm:$0xf]
    %v99 = vld [vmem:[#allocation5 + $0x18] sm:$0xf]
    %v100 = vld [vmem:[#allocation5 + $0x1c] sm:$0xf]
    %v101 = vld [vmem:[#allocation5 + $0x20] sm:$0xf]
    %v102 = vld [vmem:[#allocation5 + $0x24] sm:$0xf]
    %v103 = vld [vmem:[#allocation5 + $0x28] sm:$0xf]
    %v104 = vld [vmem:[#allocation5 + $0x2c] sm:$0xf]
    %v105 = vld [vmem:[#allocation5 + $0x30] sm:$0xf]
    %v106 = vld [vmem:[#allocation5 + $0x34] sm:$0xf]
    %v107 = vld [vmem:[#allocation5 + $0x38] sm:$0xf]
    %v108 = vld [vmem:[#allocation5 + $0x3c] sm:$0xf]
    %v125 = vunpack.c.l.b16 %v77
    %v126 = vunpack.c.l.b16 %v78
    %v127 = vunpack.c.l.b16 %v79
    %v128 = vunpack.c.l.b16 %v80
    %v129 = vunpack.c.l.b16 %v81
    %v130 = vunpack.c.l.b16 %v82
    %v131 = vunpack.c.l.b16 %v83
    %v132 = vunpack.c.l.b16 %v84
    %v133 = vunpack.c.l.b16 %v85
    %v134 = vunpack.c.l.b16 %v86
    %v135 = vunpack.c.l.b16 %v87
    %v136 = vunpack.c.l.b16 %v88
    %v137 = vunpack.c.l.b16 %v89
    %v138 = vunpack.c.l.b16 %v90
    %v139 = vunpack.c.l.b16 %v91
    %v140 = vunpack.c.l.b16 %v92
    %v141 = vpack.c.b16 %v126, %v125
    %v142 = vpack.c.b16 %v128, %v127
    %v143 = vpack.c.b16 %v130, %v129
    %v144 = vpack.c.b16 %v132, %v131
    %v145 = vpack.c.b16 %v134, %v133
    %v146 = vpack.c.b16 %v136, %v135
    %v147 = vpack.c.b16 %v138, %v137
    %v148 = vpack.c.b16 %v140, %v139
    %v173 = vunpack.c.l.b16 %v93
    %v174 = vunpack.c.l.b16 %v94
    %v175 = vunpack.c.l.b16 %v95
    %v176 = vunpack.c.l.b16 %v96
    %v177 = vunpack.c.l.b16 %v97
    %v178 = vunpack.c.l.b16 %v98
    %v179 = vunpack.c.l.b16 %v99
    %v180 = vunpack.c.l.b16 %v100
    %v181 = vunpack.c.l.b16 %v101
    %v182 = vunpack.c.l.b16 %v102
    %v183 = vunpack.c.l.b16 %v103
    %v184 = vunpack.c.l.b16 %v104
    %v185 = vunpack.c.l.b16 %v105
    %v186 = vunpack.c.l.b16 %v106
    %v187 = vunpack.c.l.b16 %v107
    %v188 = vunpack.c.l.b16 %v108
    %v189 = vpack.c.b16 %v174, %v173
    %v190 = vpack.c.b16 %v176, %v175
    %v191 = vpack.c.b16 %v178, %v177
    %v192 = vpack.c.b16 %v180, %v179
    %v193 = vpack.c.b16 %v182, %v181
    %v194 = vpack.c.b16 %v184, %v183
    %v195 = vpack.c.b16 %v186, %v185
    %v196 = vpack.c.b16 %v188, %v187
    %205 = vmatprep.subr.bf16.mxu0 0
    %206 = vmatpush1.bf16.msra.mxu0 %v196
    %207 = vmatprep.subr.bf16.mxu0 0
    %208 = vmatpush1.bf16.msra.mxu0 %v195
    %209 = vmatprep.subr.bf16.mxu0 0
    %210 = vmatpush1.bf16.msra.mxu0 %v194
    %211 = vmatprep.subr.bf16.mxu0 0
    %212 = vmatpush1.bf16.msra.mxu0 %v193
    %213 = vmatprep.subr.bf16.mxu0 0
    %214 = vmatpush1.bf16.msra.mxu0 %v192
    %215 = vmatprep.subr.bf16.mxu0 0
    %216 = vmatpush1.bf16.msra.mxu0 %v191
    %217 = vmatprep.subr.bf16.mxu0 0
    %218 = vmatpush1.bf16.msra.mxu0 %v190
    %219 = vmatprep.subr.bf16.mxu0 0
    %220 = vmatpush1.bf16.msra.mxu0 %v189
    %221 = vmatprep.subr.bf16.mxu0 0
    %222 = vmatpush2.bf16.msra.mxu0 0
    %223 = vmatprep.subr.bf16.mxu0 0
    %224 = vmatpush2.bf16.msra.mxu0 0
    %225 = vmatprep.subr.bf16.mxu0 0
    %226 = vmatpush2.bf16.msra.mxu0 0
    %227 = vmatprep.subr.bf16.mxu0 0
    %228 = vmatpush2.bf16.msra.mxu0 0
    %229 = vmatprep.subr.bf16.mxu0 0
    %230 = vmatpush2.bf16.msra.mxu0 0
    %231 = vmatprep.subr.bf16.mxu0 0
    %232 = vmatpush2.bf16.msra.mxu0 0
    %233 = vmatprep.subr.bf16.mxu0 0
    %234 = vmatpush2.bf16.msra.mxu0 0
    %235 = vmatprep.subr.bf16.mxu0 0
    %236 = vmatpush2.bf16.msra.mxu0 0
    %237 = vmatprep.mubr.bf16.mxu0 0
    %238 = vmatmul.mubr.bf16.gmra.mxu0 %v141
    %v239 = vpop.f32.mrf.mxu0
    %v240 = vadd.f32 0.0, %v239
    %v241 = vpop.f32.mrf.mxu0
    %v242 = vpop.f32.mrf.mxu0
    %v243 = vadd.f32 0.0, %v242
    %v244 = vpop.f32.mrf.mxu0
    %245 = vmatprep.mubr.bf16.mxu0 0
    %246 = vmatmul.mubr.bf16.gmra.mxu0 %v142
    %v247 = vpop.f32.mrf.mxu0
    %v248 = vadd.f32 0.0, %v247
    %v249 = vpop.f32.mrf.mxu0
    %v250 = vpop.f32.mrf.mxu0
    %v251 = vadd.f32 0.0, %v250
    %v252 = vpop.f32.mrf.mxu0
    %253 = vmatprep.mubr.bf16.mxu0 0
    %254 = vmatmul.mubr.bf16.gmra.mxu0 %v143
    %v255 = vpop.f32.mrf.mxu0
    %v256 = vadd.f32 0.0, %v255
    %v257 = vpop.f32.mrf.mxu0
    %v258 = vpop.f32.mrf.mxu0
    %v259 = vadd.f32 0.0, %v258
    %v260 = vpop.f32.mrf.mxu0
    %261 = vmatprep.mubr.bf16.mxu0 0
    %262 = vmatmul.mubr.bf16.gmra.mxu0 %v144
    %v263 = vpop.f32.mrf.mxu0
    %v264 = vadd.f32 0.0, %v263
    %v265 = vpop.f32.mrf.mxu0
    %v266 = vpop.f32.mrf.mxu0
    %v267 = vadd.f32 0.0, %v266
    %v268 = vpop.f32.mrf.mxu0
    %269 = vmatprep.mubr.bf16.mxu0 0
    %270 = vmatmul.mubr.bf16.gmra.mxu0 %v145
    %v271 = vpop.f32.mrf.mxu0
    %v272 = vadd.f32 0.0, %v271
    %v273 = vpop.f32.mrf.mxu0
    %v274 = vpop.f32.mrf.mxu0
    %v275 = vadd.f32 0.0, %v274
    %v276 = vpop.f32.mrf.mxu0
    %277 = vmatprep.mubr.bf16.mxu0 0
    %278 = vmatmul.mubr.bf16.gmra.mxu0 %v146
    %v279 = vpop.f32.mrf.mxu0
    %v280 = vadd.f32 0.0, %v279
    %v281 = vpop.f32.mrf.mxu0
    %v282 = vpop.f32.mrf.mxu0
    %v283 = vadd.f32 0.0, %v282
    %v284 = vpop.f32.mrf.mxu0
    %285 = vmatprep.mubr.bf16.mxu0 0
    %286 = vmatmul.mubr.bf16.gmra.mxu0 %v147
    %v287 = vpop.f32.mrf.mxu0
    %v288 = vadd.f32 0.0, %v287
    %v289 = vpop.f32.mrf.mxu0
    %v290 = vpop.f32.mrf.mxu0
    %v291 = vadd.f32 0.0, %v290
    %v292 = vpop.f32.mrf.mxu0
    %293 = vmatprep.mubr.bf16.mxu0 0
    %294 = vmatmul.mubr.bf16.gmra.mxu0 %v148
    %v295 = vpop.f32.mrf.mxu0
    %v296 = vadd.f32 0.0, %v295
    %v297 = vpop.f32.mrf.mxu0
    %v298 = vpop.f32.mrf.mxu0
    %v299 = vadd.f32 0.0, %v298
    %v300 = vpop.f32.mrf.mxu0
    %301 = vdwg.mxu0
    %v302 = vld [vmem:[#allocation7] sm:$0xff]
    %v303 = vld [vmem:[#allocation7 + $0x8] sm:$0xff]
    %v304 = vadd.f32 %v240, %v302
    %v305 = vadd.f32 %v243, %v303
    %v306 = vadd.f32 %v248, %v302
    %v307 = vadd.f32 %v251, %v303
    %v308 = vadd.f32 %v256, %v302
    %v309 = vadd.f32 %v259, %v303
    %v310 = vadd.f32 %v264, %v302
    %v311 = vadd.f32 %v267, %v303
    %v312 = vadd.f32 %v272, %v302
    %v313 = vadd.f32 %v275, %v303
    %v314 = vadd.f32 %v280, %v302
    %v315 = vadd.f32 %v283, %v303
    %v316 = vadd.f32 %v288, %v302
    %v317 = vadd.f32 %v291, %v303
    %v318 = vadd.f32 %v296, %v302
    %v319 = vadd.f32 %v299, %v303
    %v320 = vmax.f32 %v304, 0.0
    %v321 = vmax.f32 %v305, 0.0
    %v322 = vmax.f32 %v306, 0.0
    %v323 = vmax.f32 %v307, 0.0
    %v324 = vmax.f32 %v308, 0.0
    %v325 = vmax.f32 %v309, 0.0
    %v326 = vmax.f32 %v310, 0.0
    %v327 = vmax.f32 %v311, 0.0
    %v328 = vmax.f32 %v312, 0.0
    %v329 = vmax.f32 %v313, 0.0
    %v330 = vmax.f32 %v314, 0.0
    %v331 = vmax.f32 %v315, 0.0
    %v332 = vmax.f32 %v316, 0.0
    %v333 = vmax.f32 %v317, 0.0
    %v334 = vmax.f32 %v318, 0.0
    %v335 = vmax.f32 %v319, 0.0
    %v336 = vmax.f32 %v320, %v321
    %v337 = vrot.slane %v336, 4
    %v338 = vmax.f32 %v336, %v337
    %v339 = vrot.slane %v338, 2
    %v340 = vmax.f32 %v338, %v339
    %v341 = vrot.slane %v340, 1
    %v342 = vmax.f32 %v340, %v341
    %v343 = vmax.f32 %v322, %v323
    %v344 = vrot.slane %v343, 4
    %v345 = vmax.f32 %v343, %v344
    %v346 = vrot.slane %v345, 2
    %v347 = vmax.f32 %v345, %v346
    %v348 = vrot.slane %v347, 1
    %v349 = vmax.f32 %v347, %v348
    %v350 = vmax.f32 %v324, %v325
    %v351 = vrot.slane %v350, 4
    %v352 = vmax.f32 %v350, %v351
    %v353 = vrot.slane %v352, 2
    %v354 = vmax.f32 %v352, %v353
    %v355 = vrot.slane %v354, 1
    %v356 = vmax.f32 %v354, %v355
    %v357 = vmax.f32 %v326, %v327
    %v358 = vrot.slane %v357, 4
    %v359 = vmax.f32 %v357, %v358
    %v360 = vrot.slane %v359, 2
    %v361 = vmax.f32 %v359, %v360
    %v362 = vrot.slane %v361, 1
    %v363 = vmax.f32 %v361, %v362
    %v364 = vmax.f32 %v328, %v329
    %v365 = vrot.slane %v364, 4
    %v366 = vmax.f32 %v364, %v365
    %v367 = vrot.slane %v366, 2
    %v368 = vmax.f32 %v366, %v367
    %v369 = vrot.slane %v368, 1
    %v370 = vmax.f32 %v368, %v369
    %v371 = vmax.f32 %v330, %v331
    %v372 = vrot.slane %v371, 4
    %v373 = vmax.f32 %v371, %v372
    %v374 = vrot.slane %v373, 2
    %v375 = vmax.f32 %v373, %v374
    %v376 = vrot.slane %v375, 1
    %v377 = vmax.f32 %v375, %v376
    %v378 = vmax.f32 %v332, %v333
    %v379 = vrot.slane %v378, 4
    %v380 = vmax.f32 %v378, %v379
    %v381 = vrot.slane %v380, 2
    %v382 = vmax.f32 %v380, %v381
    %v383 = vrot.slane %v382, 1
    %v384 = vmax.f32 %v382, %v383
    %v385 = vmax.f32 %v334, %v335
    %v386 = vrot.slane %v385, 4
    %v387 = vmax.f32 %v385, %v386
    %v388 = vrot.slane %v387, 2
    %v389 = vmax.f32 %v387, %v388
    %v390 = vrot.slane %v389, 1
    %v391 = vmax.f32 %v389, %v390
    %v392 = vpack.c.bf16 %v342, %v342
    %v393 = vpack.c.bf16 %v349, %v349
    %v394 = vpack.c.bf16 %v356, %v356
    %v395 = vpack.c.bf16 %v363, %v363
    %v396 = vpack.c.bf16 %v370, %v370
    %v397 = vpack.c.bf16 %v377, %v377
    %v398 = vpack.c.bf16 %v384, %v384
    %v399 = vpack.c.bf16 %v391, %v391
    %v400 = vld [vmem:[#allocation8] sm:$0xf]
    %v401 = vld [vmem:[#allocation8 + $0x4] sm:$0xf]
    %v402 = vld [vmem:[#allocation8 + $0x8] sm:$0xf]
    %v403 = vld [vmem:[#allocation8 + $0xc] sm:$0xf]
    %v404 = vld [vmem:[#allocation8 + $0x10] sm:$0xf]
    %v405 = vld [vmem:[#allocation8 + $0x14] sm:$0xf]
    %v406 = vld [vmem:[#allocation8 + $0x18] sm:$0xf]
    %v407 = vld [vmem:[#allocation8 + $0x1c] sm:$0xf]
    %v408 = vld [vmem:[#allocation8 + $0x20] sm:$0xf]
    %v409 = vld [vmem:[#allocation8 + $0x24] sm:$0xf]
    %v410 = vld [vmem:[#allocation8 + $0x28] sm:$0xf]
    %v411 = vld [vmem:[#allocation8 + $0x2c] sm:$0xf]
    %v412 = vld [vmem:[#allocation8 + $0x30] sm:$0xf]
    %v413 = vld [vmem:[#allocation8 + $0x34] sm:$0xf]
    %v414 = vld [vmem:[#allocation8 + $0x38] sm:$0xf]
    %v415 = vld [vmem:[#allocation8 + $0x3c] sm:$0xf]
    %v416 = vld [vmem:[%s4] sm:$0x1]
    %v418 = vlaneseq
    %v419 = vshrl.u32 %v418, 7
    %v420 = vsub.s32 0, %v419
    %v421 = vrot.slane %v416, %v420
    %v431 = vunpack.c.l.b16 %v392
    %v432 = vunpack.c.l.b16 %v393
    %v433 = vunpack.c.l.b16 %v394
    %v434 = vunpack.c.l.b16 %v395
    %v435 = vunpack.c.l.b16 %v396
    %v436 = vunpack.c.l.b16 %v397
    %v437 = vunpack.c.l.b16 %v398
    %v438 = vunpack.c.l.b16 %v399
    %vm439 = vcmask 1041409
    %v440 = vsel %vm439, %v432, %v431
    %vm441 = vcmask 1042434
    %v442 = vsel %vm441, %v433, %v440
    %vm443 = vcmask 1043459
    %v444 = vsel %vm443, %v434, %v442
    %vm445 = vcmask 1044484
    %v446 = vsel %vm445, %v435, %v444
    %vm447 = vcmask 1045509
    %v448 = vsel %vm447, %v436, %v446
    %vm449 = vcmask 1046534
    %v450 = vsel %vm449, %v437, %v448
    %vm451 = vcmask 1047559
    %v452 = vsel %vm451, %v438, %v450
    %v453 = vpack.c.b16 %v452, %v452
    %v471 = vunpack.c.l.b16 %v400
    %v472 = vunpack.c.l.b16 %v401
    %v473 = vunpack.c.l.b16 %v402
    %v474 = vunpack.c.l.b16 %v403
    %v475 = vunpack.c.l.b16 %v404
    %v476 = vunpack.c.l.b16 %v405
    %v477 = vunpack.c.l.b16 %v406
    %v478 = vunpack.c.l.b16 %v407
    %v479 = vunpack.c.l.b16 %v408
    %v480 = vunpack.c.l.b16 %v409
    %v481 = vunpack.c.l.b16 %v410
    %v482 = vunpack.c.l.b16 %v411
    %v483 = vunpack.c.l.b16 %v412
    %v484 = vunpack.c.l.b16 %v413
    %v485 = vunpack.c.l.b16 %v414
    %v486 = vunpack.c.l.b16 %v415
    %v487 = vpack.c.b16 %v472, %v471
    %v488 = vpack.c.b16 %v474, %v473
    %v489 = vpack.c.b16 %v476, %v475
    %v490 = vpack.c.b16 %v478, %v477
    %v491 = vpack.c.b16 %v480, %v479
    %v492 = vpack.c.b16 %v482, %v481
    %v493 = vpack.c.b16 %v484, %v483
    %v494 = vpack.c.b16 %v486, %v485
    %503 = vmatprep.subr.bf16.mxu0 0
    %504 = vmatpush1.bf16.msra.mxu0 %v494
    %505 = vmatprep.subr.bf16.mxu0 0
    %506 = vmatpush1.bf16.msra.mxu0 %v493
    %507 = vmatprep.subr.bf16.mxu0 0
    %508 = vmatpush1.bf16.msra.mxu0 %v492
    %509 = vmatprep.subr.bf16.mxu0 0
    %510 = vmatpush1.bf16.msra.mxu0 %v491
    %511 = vmatprep.subr.bf16.mxu0 0
    %512 = vmatpush1.bf16.msra.mxu0 %v490
    %513 = vmatprep.subr.bf16.mxu0 0
    %514 = vmatpush1.bf16.msra.mxu0 %v489
    %515 = vmatprep.subr.bf16.mxu0 0
    %516 = vmatpush1.bf16.msra.mxu0 %v488
    %517 = vmatprep.subr.bf16.mxu0 0
    %518 = vmatpush1.bf16.msra.mxu0 %v487
    %519 = vmatprep.subr.bf16.mxu0 0
    %520 = vmatpush2.bf16.msra.mxu0 0
    %521 = vmatprep.subr.bf16.mxu0 0
    %522 = vmatpush2.bf16.msra.mxu0 0
    %523 = vmatprep.subr.bf16.mxu0 0
    %524 = vmatpush2.bf16.msra.mxu0 0
    %525 = vmatprep.subr.bf16.mxu0 0
    %526 = vmatpush2.bf16.msra.mxu0 0
    %527 = vmatprep.subr.bf16.mxu0 0
    %528 = vmatpush2.bf16.msra.mxu0 0
    %529 = vmatprep.subr.bf16.mxu0 0
    %530 = vmatpush2.bf16.msra.mxu0 0
    %531 = vmatprep.subr.bf16.mxu0 0
    %532 = vmatpush2.bf16.msra.mxu0 0
    %533 = vmatprep.subr.bf16.mxu0 0
    %534 = vmatpush2.bf16.msra.mxu0 0
    %535 = vmatprep.mubr.bf16.mxu0 0
    %536 = vmatmul.mubr.bf16.gmra.mxu0 %v453
    %v537 = vpop.f32.mrf.mxu0
    %v538 = vadd.f32 %v421, %v537
    %v539 = vpop.f32.mrf.mxu0
    %v540 = vpop.f32.mrf.mxu0
    %v541 = vpop.f32.mrf.mxu0
    %542 = vdwg.mxu0
    %543 = vst [vmem:[#allocation10] sm:$0xff] %v538
    // Predicated region
    $region38: #{tpu_custom_call.1} parent=1 // pred_check
      _
    $region39: #{tpu_custom_call.1} parent=1 // pred_check_branch
      %545 = sbr.rel (0) target = $region41
    $region40: #{tpu_custom_call.1} parent=1 // pred_region
      %s547 = ssub.s32 128, 128
      %548 = vsyncadd [#allocation4], %s547
      %s550 = sshll.u32 [#allocation10], 4
      %s551 = int_to_ptr.vmem [resolvable:$true] %s550
      %553 = dma.vmem_to_hbm [thread:$0]  %s551, 128, %s5, [#allocation4]
    $region41: #{tpu_custom_call.1} parent=1 // pred_fallthru
      _
    // Predicated region
    $region42: #{tpu_custom_call.1} parent=1 // pred_check
      _
    $region43: #{tpu_custom_call.1} parent=1 // pred_check_branch
      %555 = sbr.rel (0) target = $region45
    $region44: #{tpu_custom_call.1} parent=1 // pred_region
      %556 = dma.done [#allocation4], 128
    $region45: #{tpu_custom_call.1} parent=1 // pred_fallthru
      _
    %557 = vsyncpa [#allocation3], 1
    %558 = vsyncpa [#allocation6], 1
    %559 = vsyncpa [#allocation9], 1
    %560 = vsyncpa [#allocation4], 1

</llo_original>
